<compile_context>
chip_gen: v6e
topology: v6e:2x2x1
jax: 0.10.0
libtpu: 0.0.40
codegen_flags: <defaults>
</compile_context>

<pallas_src>
import math
import jax
import jax.numpy as jnp
from jax import lax
from jax.experimental import pallas as pl
from jax.experimental.pallas import tpu as pltpu

# ---- model dims (small, consistent with the module) ----
B, S, D = 2, 8, 32        # batch, seq, d_model (== EncoderLayer.size)
H = 4                     # attention heads
DK = D // H               # per-head dim
DFF = 64                  # feed-forward hidden dim
EPS = 1e-6
BS = B * S                # 16 tokens
HBS = H * BS              # 64 head-stacked rows
W = 3 * D                 # 96: lane width of the packed small-operand slabs


def _layernorm(x, gamma, beta):
    # PyTorch LayerNorm module semantics: mean over last dim, unbiased std,
    # gamma*(x-mean)/(std+eps)+beta.  Reciprocal is computed on the narrow
    # [rows, 1] column and applied with a VPU multiply.
    mean = jnp.mean(x, axis=-1, keepdims=True)
    xc = x - mean
    var = jnp.sum(xc * xc, axis=-1, keepdims=True) * jnp.float32(1.0 / (x.shape[-1] - 1))
    inv = 1.0 / (jnp.sqrt(var) + jnp.float32(EPS))
    return gamma * (xc * inv) + beta


def encoder_layer_kernel(x_ref, bias_ref, wqkv_ref, wslab_ref, vecs_ref, out_ref):
    x = x_ref[...].astype(jnp.float32)                      # [BS, D]

    # unpack the packed [8, 96] vector slab (cheap sublane/lane slices)
    vecs = vecs_ref[...]
    ln1g = vecs[0:1, 0:D]
    ln1b = vecs[1:2, 0:D]
    ln2g = vecs[2:3, 0:D]
    ln2b = vecs[3:4, 0:D]
    bqkv = vecs[4:5, :]                                     # [1, 3D] head-major
    bo   = vecs[5:6, 0:D]
    b1   = vecs[6:7, 0:DFF]
    b2   = vecs[7:8, 0:D]

    # unpack the packed [96, 96] weight slab
    wslab = wslab_ref[...]
    wo = wslab[0:D, 0:D]
    w1 = wslab[0:D, D:D + DFF]
    w2 = wslab[D:D + DFF, 0:D]

    # ---------------- sublayer 0: multi-head self-attention ----------------
    xn = _layernorm(x, ln1g, ln1b)                          # [BS, D]

    # fused head-major QKV projection: one [BS,D] @ [D,3D] MXU push;
    # column block h holds [q_h | k_h | v_h] (3*DK wide)
    qkv = jnp.dot(xn, wqkv_ref[...],
                  preferred_element_type=jnp.float32) + bqkv       # [BS, 3D]

    # stack heads along sublanes (register-level concat, no VMEM stores):
    # row r = h*BS + (b*S + s)
    qkv_s = jnp.concatenate(
        [qkv[:, h * 3 * DK:(h + 1) * 3 * DK] for h in range(H)], axis=0)   # [HBS, 3*DK]
    q = qkv_s[:, 0:DK]
    k = qkv_s[:, DK:2 * DK]
    v = qkv_s[:, 2 * DK:3 * DK]

    # one stacked score matmul over the full head-block cross product
    s = lax.dot_general(q, k, (((1,), (1,)), ((), ())),
                        preferred_element_type=jnp.float32)         # [HBS, HBS]
    s = s * jnp.float32(1.0 / math.sqrt(DK)) + bias_ref[...]

    # single stacked softmax; off-block / masked entries -> exp(...-1e9) == 0
    m = jnp.max(s, axis=-1, keepdims=True)
    e = jnp.exp(s - m)
    l = jnp.sum(e, axis=-1, keepdims=True)                  # [HBS, 1]
    # deferred normalization: PV matmul first, then scale by 1/l
    ctx = jnp.dot(e, v, preferred_element_type=jnp.float32) * (1.0 / l)    # [HBS, DK]

    # reassemble heads along lanes (register-level) and project through Wo
    ctx_bd = jnp.concatenate(
        [ctx[h * BS:(h + 1) * BS, :] for h in range(H)], axis=1)           # [BS, D]
    proj = jnp.dot(ctx_bd, wo, preferred_element_type=jnp.float32) + bo
    x1 = x + proj                                           # residual (dropout == identity)

    # ---------------- sublayer 1: position-wise feed-forward ----------------
    x1n = _layernorm(x1, ln2g, ln2b)
    hdd = jnp.maximum(jnp.dot(x1n, w1, preferred_element_type=jnp.float32) + b1, 0.0)
    ff = jnp.dot(hdd, w2, preferred_element_type=jnp.float32) + b2

    # single fused store of the whole result
    out_ref[...] = (x1 + ff).astype(out_ref.dtype)


def encoder_layer(x, mask, params):
    (ln1g, ln1b, wq, bq, wk, bk, wv, bv, wo, bo,
     ln2g, ln2b, w1, fb1, w2, fb2) = params
    f32 = jnp.float32

    # --- one-time operand packing (layout plumbing in the wrapper) ---
    # head-major fused QKV weight/bias: column block h = [Wq_h | Wk_h | Wv_h]
    wqkv = jnp.concatenate(
        [jnp.concatenate([wq[:, h * DK:(h + 1) * DK],
                          wk[:, h * DK:(h + 1) * DK],
                          wv[:, h * DK:(h + 1) * DK]], axis=1) for h in range(H)],
        axis=1)                                                        # [D, 3D]
    bqkv = jnp.concatenate(
        [jnp.concatenate([bq[:, h * DK:(h + 1) * DK],
                          bk[:, h * DK:(h + 1) * DK],
                          bv[:, h * DK:(h + 1) * DK]], axis=1) for h in range(H)],
        axis=1)                                                        # [1, 3D]

    # weight slab [96, 96]: rows 0:D = [Wo | W1], rows D:D+DFF = [W2 | 0]
    top = jnp.concatenate([wo, w1], axis=1)                            # [32, 96]
    bot = jnp.concatenate([w2, jnp.zeros((DFF, DFF), f32)], axis=1)    # [64, 96]
    wslab = jnp.concatenate([top, bot], axis=0)                        # [96, 96]

    # small-vector slab [8, 96] (zero-padded rows)
    def pad_w(v):
        return jnp.pad(v, ((0, 0), (0, W - v.shape[1])))
    vecs = jnp.concatenate([pad_w(ln1g), pad_w(ln1b), pad_w(ln2g), pad_w(ln2b),
                            bqkv, pad_w(bo), pad_w(fb1), pad_w(fb2)], axis=0)   # [8, 96]

    # additive attention bias for the head-stacked [HBS, HBS] score matrix:
    # row r = h*BS + b*S + s_q, col c = h'*BS + b'*S + s_k
    # 0 where (h==h', b==b', mask[b, s_q, s_k] != 0), else -1e9
    m3 = jnp.broadcast_to(mask.astype(f32), (B, S, S))
    r = jnp.arange(HBS)
    r_h, r_bs = r // BS, r % BS
    r_b, r_s = r_bs // S, r_bs % S
    same_blk = (r_h[:, None] == r_h[None, :]) & (r_b[:, None] == r_b[None, :])
    keymask = m3[r_b[:, None], r_s[:, None], r_s[None, :]]             # [HBS, HBS]
    bias = jnp.where(same_blk & (keymask != 0), f32(0.0), f32(-1e9)).astype(f32)

    xf = x.reshape(BS, D)                                   # flatten batch for the kernel

    vmem = pltpu.MemorySpace.VMEM
    spec = lambda: pl.BlockSpec(memory_space=vmem)

    # Single fused step (no grid): whole-array VMEM residency is < 64 KiB.
    # TODO(synk): at production token counts, switch to a token-block grid with
    # dimension_semantics=("parallel",) so both v7x TensorCores are used.
    out = pl.pallas_call(
        encoder_layer_kernel,
        out_shape=jax.ShapeDtypeStruct((BS, D), x.dtype),
        in_specs=[spec() for _ in range(5)],
        out_specs=spec(),
    )(xf, bias, wqkv, wslab, vecs)
    return out.reshape(B, S, D)


# ---------------- pure-JAX reference (for correctness check) ----------------
def _torch_layernorm_ref(x, gamma, beta):
    mean = jnp.mean(x, axis=-1, keepdims=True)
    var = jnp.sum((x - mean) ** 2, axis=-1, keepdims=True) / (x.shape[-1] - 1)
    std = jnp.sqrt(var)
    return gamma * (x - mean) / (std + EPS) + beta


def reference(x, mask, params):
    (ln1g, ln1b, wq, bq, wk, bk, wv, bv, wo, bo,
     ln2g, ln2b, w1, fb1, w2, fb2) = params

    xn = _torch_layernorm_ref(x, ln1g, ln1b)                # [B,S,D]
    q = xn @ wq + bq
    k = xn @ wk + bk
    v = xn @ wv + bv
    qh = q.reshape(B, S, H, DK).transpose(0, 2, 1, 3)       # [B,H,S,DK]
    kh = k.reshape(B, S, H, DK).transpose(0, 2, 1, 3)
    vh = v.reshape(B, S, H, DK).transpose(0, 2, 1, 3)
    scores = jnp.einsum("bhqd,bhkd->bhqk", qh, kh) / math.sqrt(DK)
    scores = jnp.where(mask[:, None, :, :] == 0, -1e9, scores)
    p = jax.nn.softmax(scores, axis=-1)
    attn = jnp.einsum("bhqk,bhkd->bhqd", p, vh).transpose(0, 2, 1, 3).reshape(B, S, D)
    attn = attn @ wo + bo
    x1 = x + attn
    x1n = _torch_layernorm_ref(x1, ln2g, ln2b)
    ff = jnp.maximum(x1n @ w1 + fb1, 0.0) @ w2 + fb2
    return x1 + ff


if __name__ == "__main__":
    key = jax.random.PRNGKey(0)
    ks = jax.random.split(key, 16)

    x = jax.random.normal(ks[0], (B, S, D), dtype=jnp.float32)
    # mask: keep first `len` positions per batch element (1 = attend, 0 = masked)
    lens = jnp.array([S, S - 2], dtype=jnp.int32)
    mask = (jnp.arange(S)[None, None, :] < lens[:, None, None]).astype(jnp.float32)  # [B,1,S]

    sd = 0.1
    params = (
        jnp.ones((1, D), jnp.float32),                               # ln1 gamma
        jnp.zeros((1, D), jnp.float32),                              # ln1 beta
        sd * jax.random.normal(ks[1], (D, D), jnp.float32),          # Wq
        sd * jax.random.normal(ks[2], (1, D), jnp.float32),          # bq
        sd * jax.random.normal(ks[3], (D, D), jnp.float32),          # Wk
        sd * jax.random.normal(ks[4], (1, D), jnp.float32),          # bk
        sd * jax.random.normal(ks[5], (D, D), jnp.float32),          # Wv
        sd * jax.random.normal(ks[6], (1, D), jnp.float32),          # bv
        sd * jax.random.normal(ks[7], (D, D), jnp.float32),          # Wo
        sd * jax.random.normal(ks[8], (1, D), jnp.float32),          # bo
        jnp.ones((1, D), jnp.float32),                               # ln2 gamma
        jnp.zeros((1, D), jnp.float32),                              # ln2 beta
        sd * jax.random.normal(ks[9], (D, DFF), jnp.float32),        # W1
        sd * jax.random.normal(ks[10], (1, DFF), jnp.float32),       # b1
        sd * jax.random.normal(ks[11], (DFF, D), jnp.float32),       # W2
        sd * jax.random.normal(ks[12], (1, D), jnp.float32),         # b2
    )

    out = encoder_layer(x, mask, params)
    out = jax.block_until_ready(out)

    ref = reference(x, mask, params)
    assert out.shape == (B, S, D)
    assert jnp.allclose(out, ref, atol=1e-4, rtol=1e-4), \
        f"max abs diff {jnp.max(jnp.abs(out - ref))}"

    print("KERNEL_OK")
</pallas_src>

<mosaic_0001>
module attributes {stable_mosaic.version = 11 : i64} {
  func.func @encoder_layer_kernel(%arg0: memref<16x32xf32, #tpu.memory_space<vmem>>, %arg1: memref<64x64xf32, #tpu.memory_space<vmem>>, %arg2: memref<32x96xf32, #tpu.memory_space<vmem>>, %arg3: memref<96x96xf32, #tpu.memory_space<vmem>>, %arg4: memref<8x96xf32, #tpu.memory_space<vmem>>, %arg5: memref<16x32xf32, #tpu.memory_space<vmem>>) attributes {dimension_semantics = [], scalar_prefetch = 0 : i64, scratch_operands = 0 : i64, tpu.core_type = #tpu.core_type<tc>} {
    %c0 = arith.constant 0 : index
    %c0_0 = arith.constant 0 : index
    %0 = vector.load %arg0[%c0, %c0_0] : memref<16x32xf32, #tpu.memory_space<vmem>>, vector<16x32xf32>
    %c0_1 = arith.constant 0 : index
    %c0_2 = arith.constant 0 : index
    %1 = vector.load %arg4[%c0_1, %c0_2] : memref<8x96xf32, #tpu.memory_space<vmem>>, vector<8x96xf32>
    %2 = vector.extract_strided_slice %1 {offsets = [0, 0], sizes = [1, 32], strides = [1, 1]} : vector<8x96xf32> to vector<1x32xf32>
    %3 = vector.extract_strided_slice %1 {offsets = [1, 0], sizes = [1, 32], strides = [1, 1]} : vector<8x96xf32> to vector<1x32xf32>
    %4 = vector.extract_strided_slice %1 {offsets = [2, 0], sizes = [1, 32], strides = [1, 1]} : vector<8x96xf32> to vector<1x32xf32>
    %5 = vector.extract_strided_slice %1 {offsets = [3, 0], sizes = [1, 32], strides = [1, 1]} : vector<8x96xf32> to vector<1x32xf32>
    %6 = vector.extract_strided_slice %1 {offsets = [4, 0], sizes = [1, 96], strides = [1, 1]} : vector<8x96xf32> to vector<1x96xf32>
    %7 = vector.extract_strided_slice %1 {offsets = [5, 0], sizes = [1, 32], strides = [1, 1]} : vector<8x96xf32> to vector<1x32xf32>
    %8 = vector.extract_strided_slice %1 {offsets = [6, 0], sizes = [1, 64], strides = [1, 1]} : vector<8x96xf32> to vector<1x64xf32>
    %9 = vector.extract_strided_slice %1 {offsets = [7, 0], sizes = [1, 32], strides = [1, 1]} : vector<8x96xf32> to vector<1x32xf32>
    %c0_3 = arith.constant 0 : index
    %c0_4 = arith.constant 0 : index
    %10 = vector.load %arg3[%c0_3, %c0_4] : memref<96x96xf32, #tpu.memory_space<vmem>>, vector<96x96xf32>
    %11 = vector.extract_strided_slice %10 {offsets = [0, 0], sizes = [32, 32], strides = [1, 1]} : vector<96x96xf32> to vector<32x32xf32>
    %12 = vector.extract_strided_slice %10 {offsets = [0, 32], sizes = [32, 64], strides = [1, 1]} : vector<96x96xf32> to vector<32x64xf32>
    %13 = vector.extract_strided_slice %10 {offsets = [32, 0], sizes = [64, 32], strides = [1, 1]} : vector<96x96xf32> to vector<64x32xf32>
    %cst = arith.constant dense<0.000000e+00> : vector<16xf32>
    %14 = vector.multi_reduction <add>, %0, %cst [1] : vector<16x32xf32> to vector<16xf32>
    %15 = vector.shape_cast %14 : vector<16xf32> to vector<16x1xf32>
    %cst_5 = arith.constant 3.200000e+01 : f32
    %16 = vector.broadcast %cst_5 : f32 to vector<16x1xf32>
    %17 = arith.divf %15, %16 : vector<16x1xf32>
    %18 = vector.broadcast %17 : vector<16x1xf32> to vector<16x32xf32>
    %19 = arith.subf %0, %18 : vector<16x32xf32>
    %20 = arith.mulf %19, %19 : vector<16x32xf32>
    %cst_6 = arith.constant dense<0.000000e+00> : vector<16xf32>
    %21 = vector.multi_reduction <add>, %20, %cst_6 [1] : vector<16x32xf32> to vector<16xf32>
    %22 = vector.shape_cast %21 : vector<16xf32> to vector<16x1xf32>
    %cst_7 = arith.constant 0.0322580636 : f32
    %23 = vector.broadcast %cst_7 : f32 to vector<16x1xf32>
    %24 = arith.mulf %22, %23 : vector<16x1xf32>
    %25 = math.sqrt %24 : vector<16x1xf32>
    %cst_8 = arith.constant 9.99999997E-7 : f32
    %26 = vector.broadcast %cst_8 : f32 to vector<16x1xf32>
    %27 = arith.addf %25, %26 : vector<16x1xf32>
    %cst_9 = arith.constant 1.000000e+00 : f32
    %28 = vector.broadcast %cst_9 : f32 to vector<16x1xf32>
    %29 = arith.divf %28, %27 : vector<16x1xf32>
    %30 = vector.broadcast %29 : vector<16x1xf32> to vector<16x32xf32>
    %31 = arith.mulf %19, %30 : vector<16x32xf32>
    %32 = vector.broadcast %2 : vector<1x32xf32> to vector<16x32xf32>
    %33 = arith.mulf %32, %31 : vector<16x32xf32>
    %34 = vector.broadcast %3 : vector<1x32xf32> to vector<16x32xf32>
    %35 = arith.addf %33, %34 : vector<16x32xf32>
    %c0_10 = arith.constant 0 : index
    %c0_11 = arith.constant 0 : index
    %36 = vector.load %arg2[%c0_10, %c0_11] : memref<32x96xf32, #tpu.memory_space<vmem>>, vector<32x96xf32>
    %cst_12 = arith.constant dense<0.000000e+00> : vector<16x96xf32>
    %37 = tpu.matmul %35, %36, %cst_12 {dimension_numbers = #tpu.dot_dimension_numbers<[1], [0], [0], [1], [0, 0, 1, 1], [], []>} : vector<16x32xf32>, vector<32x96xf32>, vector<16x96xf32> -> vector<16x96xf32>
    %38 = vector.broadcast %6 : vector<1x96xf32> to vector<16x96xf32>
    %39 = arith.addf %37, %38 : vector<16x96xf32>
    %40 = vector.extract_strided_slice %39 {offsets = [0, 0], sizes = [16, 24], strides = [1, 1]} : vector<16x96xf32> to vector<16x24xf32>
    %41 = vector.extract_strided_slice %39 {offsets = [0, 24], sizes = [16, 24], strides = [1, 1]} : vector<16x96xf32> to vector<16x24xf32>
    %42 = vector.extract_strided_slice %39 {offsets = [0, 48], sizes = [16, 24], strides = [1, 1]} : vector<16x96xf32> to vector<16x24xf32>
    %43 = vector.extract_strided_slice %39 {offsets = [0, 72], sizes = [16, 24], strides = [1, 1]} : vector<16x96xf32> to vector<16x24xf32>
    %44 = tpu.concatenate %40, %41, %42, %43 in 0 : vector<16x24xf32>, vector<16x24xf32>, vector<16x24xf32>, vector<16x24xf32> -> vector<64x24xf32>
    %45 = vector.extract_strided_slice %44 {offsets = [0, 0], sizes = [64, 8], strides = [1, 1]} : vector<64x24xf32> to vector<64x8xf32>
    %46 = vector.extract_strided_slice %44 {offsets = [0, 8], sizes = [64, 8], strides = [1, 1]} : vector<64x24xf32> to vector<64x8xf32>
    %47 = vector.extract_strided_slice %44 {offsets = [0, 16], sizes = [64, 8], strides = [1, 1]} : vector<64x24xf32> to vector<64x8xf32>
    %cst_13 = arith.constant dense<0.000000e+00> : vector<64x64xf32>
    %48 = tpu.matmul %45, %46, %cst_13 {dimension_numbers = #tpu.dot_dimension_numbers<[1], [1], [0], [0], [0, 0, 1, 0], [], []>} : vector<64x8xf32>, vector<64x8xf32>, vector<64x64xf32> -> vector<64x64xf32>
    %cst_14 = arith.constant 0.353553385 : f32
    %49 = vector.broadcast %cst_14 : f32 to vector<64x64xf32>
    %50 = arith.mulf %48, %49 : vector<64x64xf32>
    %c0_15 = arith.constant 0 : index
    %c0_16 = arith.constant 0 : index
    %51 = vector.load %arg1[%c0_15, %c0_16] : memref<64x64xf32, #tpu.memory_space<vmem>>, vector<64x64xf32>
    %52 = arith.addf %50, %51 : vector<64x64xf32>
    %cst_17 = arith.constant dense<0xFF800000> : vector<64xf32>
    %53 = vector.multi_reduction <maximumf>, %52, %cst_17 [1] : vector<64x64xf32> to vector<64xf32>
    %54 = vector.shape_cast %53 : vector<64xf32> to vector<64x1xf32>
    %55 = vector.broadcast %54 : vector<64x1xf32> to vector<64x64xf32>
    %56 = arith.subf %52, %55 : vector<64x64xf32>
    %57 = math.exp %56 : vector<64x64xf32>
    %cst_18 = arith.constant dense<0.000000e+00> : vector<64xf32>
    %58 = vector.multi_reduction <add>, %57, %cst_18 [1] : vector<64x64xf32> to vector<64xf32>
    %59 = vector.shape_cast %58 : vector<64xf32> to vector<64x1xf32>
    %cst_19 = arith.constant dense<0.000000e+00> : vector<64x8xf32>
    %60 = tpu.matmul %57, %47, %cst_19 {dimension_numbers = #tpu.dot_dimension_numbers<[1], [0], [0], [1], [0, 0, 1, 1], [], []>} : vector<64x64xf32>, vector<64x8xf32>, vector<64x8xf32> -> vector<64x8xf32>
    %cst_20 = arith.constant 1.000000e+00 : f32
    %61 = vector.broadcast %cst_20 : f32 to vector<64x1xf32>
    %62 = arith.divf %61, %59 : vector<64x1xf32>
    %63 = vector.broadcast %62 : vector<64x1xf32> to vector<64x8xf32>
    %64 = arith.mulf %60, %63 : vector<64x8xf32>
    %65 = vector.extract_strided_slice %64 {offsets = [0, 0], sizes = [16, 8], strides = [1, 1]} : vector<64x8xf32> to vector<16x8xf32>
    %66 = vector.extract_strided_slice %64 {offsets = [16, 0], sizes = [16, 8], strides = [1, 1]} : vector<64x8xf32> to vector<16x8xf32>
    %67 = vector.extract_strided_slice %64 {offsets = [32, 0], sizes = [16, 8], strides = [1, 1]} : vector<64x8xf32> to vector<16x8xf32>
    %68 = vector.extract_strided_slice %64 {offsets = [48, 0], sizes = [16, 8], strides = [1, 1]} : vector<64x8xf32> to vector<16x8xf32>
    %69 = tpu.concatenate %65, %66, %67, %68 in 1 : vector<16x8xf32>, vector<16x8xf32>, vector<16x8xf32>, vector<16x8xf32> -> vector<16x32xf32>
    %cst_21 = arith.constant dense<0.000000e+00> : vector<16x32xf32>
    %70 = tpu.matmul %69, %11, %cst_21 {dimension_numbers = #tpu.dot_dimension_numbers<[1], [0], [0], [1], [0, 0, 1, 1], [], []>} : vector<16x32xf32>, vector<32x32xf32>, vector<16x32xf32> -> vector<16x32xf32>
    %71 = vector.broadcast %7 : vector<1x32xf32> to vector<16x32xf32>
    %72 = arith.addf %70, %71 : vector<16x32xf32>
    %73 = arith.addf %0, %72 : vector<16x32xf32>
    %cst_22 = arith.constant dense<0.000000e+00> : vector<16xf32>
    %74 = vector.multi_reduction <add>, %73, %cst_22 [1] : vector<16x32xf32> to vector<16xf32>
    %75 = vector.shape_cast %74 : vector<16xf32> to vector<16x1xf32>
    %cst_23 = arith.constant 3.200000e+01 : f32
    %76 = vector.broadcast %cst_23 : f32 to vector<16x1xf32>
    %77 = arith.divf %75, %76 : vector<16x1xf32>
    %78 = vector.broadcast %77 : vector<16x1xf32> to vector<16x32xf32>
    %79 = arith.subf %73, %78 : vector<16x32xf32>
    %80 = arith.mulf %79, %79 : vector<16x32xf32>
    %cst_24 = arith.constant dense<0.000000e+00> : vector<16xf32>
    %81 = vector.multi_reduction <add>, %80, %cst_24 [1] : vector<16x32xf32> to vector<16xf32>
    %82 = vector.shape_cast %81 : vector<16xf32> to vector<16x1xf32>
    %cst_25 = arith.constant 0.0322580636 : f32
    %83 = vector.broadcast %cst_25 : f32 to vector<16x1xf32>
    %84 = arith.mulf %82, %83 : vector<16x1xf32>
    %85 = math.sqrt %84 : vector<16x1xf32>
    %cst_26 = arith.constant 9.99999997E-7 : f32
    %86 = vector.broadcast %cst_26 : f32 to vector<16x1xf32>
    %87 = arith.addf %85, %86 : vector<16x1xf32>
    %cst_27 = arith.constant 1.000000e+00 : f32
    %88 = vector.broadcast %cst_27 : f32 to vector<16x1xf32>
    %89 = arith.divf %88, %87 : vector<16x1xf32>
    %90 = vector.broadcast %89 : vector<16x1xf32> to vector<16x32xf32>
    %91 = arith.mulf %79, %90 : vector<16x32xf32>
    %92 = vector.broadcast %4 : vector<1x32xf32> to vector<16x32xf32>
    %93 = arith.mulf %92, %91 : vector<16x32xf32>
    %94 = vector.broadcast %5 : vector<1x32xf32> to vector<16x32xf32>
    %95 = arith.addf %93, %94 : vector<16x32xf32>
    %cst_28 = arith.constant dense<0.000000e+00> : vector<16x64xf32>
    %96 = tpu.matmul %95, %12, %cst_28 {dimension_numbers = #tpu.dot_dimension_numbers<[1], [0], [0], [1], [0, 0, 1, 1], [], []>} : vector<16x32xf32>, vector<32x64xf32>, vector<16x64xf32> -> vector<16x64xf32>
    %97 = vector.broadcast %8 : vector<1x64xf32> to vector<16x64xf32>
    %98 = arith.addf %96, %97 : vector<16x64xf32>
    %cst_29 = arith.constant 0.000000e+00 : f32
    %99 = vector.broadcast %cst_29 : f32 to vector<16x64xf32>
    %100 = arith.maximumf %98, %99 : vector<16x64xf32>
    %cst_30 = arith.constant dense<0.000000e+00> : vector<16x32xf32>
    %101 = tpu.matmul %100, %13, %cst_30 {dimension_numbers = #tpu.dot_dimension_numbers<[1], [0], [0], [1], [0, 0, 1, 1], [], []>} : vector<16x64xf32>, vector<64x32xf32>, vector<16x32xf32> -> vector<16x32xf32>
    %102 = vector.broadcast %9 : vector<1x32xf32> to vector<16x32xf32>
    %103 = arith.addf %101, %102 : vector<16x32xf32>
    %104 = arith.addf %73, %103 : vector<16x32xf32>
    %c0_31 = arith.constant 0 : index
    %c0_32 = arith.constant 0 : index
    %105 = vector.load %arg5[%c0_31, %c0_32] : memref<16x32xf32, #tpu.memory_space<vmem>>, vector<16x32xf32>
    tpu.vector_store %arg5[%c0_31, %c0_32], %104 {strides = array<i32>} : memref<16x32xf32, #tpu.memory_space<vmem>>, vector<16x32xf32>,
    return
  }
}

</mosaic_0001>

<llo_original>
// kernel: tpu_custom_call.1
$region0: #{tpu_custom_call.1}
  #allocation0 [shape = 'u32[]', space=smem, size = 0x4, offset = 0x4, fixed_abs, tag = 'smem constant byte address 0x4 - core index']
  #allocation1 [shape = 'u32[144,128]{1,0:T(1,128)}', space=vmem, size = 0x12000, scoped, tag = 'internal scratch']
  %s0 = inlined_call_operand.hbm [shape: f32[16,32], index: 0, kind: input, shape index: {}]
  %s1 = inlined_call_operand.hbm [shape: f32[64,64], index: 1, kind: input, shape index: {}]
  %s2 = inlined_call_operand.hbm [shape: f32[32,96], index: 2, kind: input, shape index: {}]
  %s3 = inlined_call_operand.hbm [shape: f32[96,96], index: 3, kind: input, shape index: {}]
  %s4 = inlined_call_operand.hbm [shape: f32[8,96], index: 4, kind: input, shape index: {}]
  %s5 = inlined_call_operand.hbm [shape: f32[16,32], index: 5, kind: output, shape index: {}]
  %s6 = sld [smem:[#allocation0]]
  $region50: #{tpu_custom_call.1} parent=0
    _
  %s8 = ssub.s32 1, %s6
  %s9 = scalar_select 0, %s8, %s6
  $region1: #{tpu_custom_call.1} parent=0
    #allocation2 [shape = 'u8[8192]{0}', space=vmem, size = 0x2000, scoped, tag = 'input window, operand 0, single buffered']
    #allocation3 [shape = 's32[1]{0}', space=sflag, size = 0x4, scoped, tag = 'scoped memory for tpu_custom_call.1']
    #allocation4 [shape = 's32[1]{0}', space=sflag, size = 0x4, scoped, tag = 'scoped memory for tpu_custom_call.1']
    #allocation5 [shape = 'u8[32768]{0}', space=vmem, size = 0x8000, scoped, tag = 'input window, operand 1, single buffered']
    #allocation6 [shape = 's32[1]{0}', space=sflag, size = 0x4, scoped, tag = 'scoped memory for tpu_custom_call.1']
    #allocation7 [shape = 'u8[16384]{0}', space=vmem, size = 0x4000, scoped, tag = 'input window, operand 2, single buffered']
    #allocation8 [shape = 'u8[49152]{0}', space=vmem, size = 0xc000, scoped, tag = 'input window, operand 3, single buffered']
    #allocation9 [shape = 's32[1]{0}', space=sflag, size = 0x4, scoped, tag = 'scoped memory for tpu_custom_call.1']
    #allocation10 [shape = 'u8[4096]{0}', space=vmem, size = 0x1000, scoped, tag = 'input window, operand 4, single buffered']
    #allocation11 [shape = 'u8[8192]{0}', space=vmem, size = 0x2000, scoped, tag = 'output window, operand 0, single buffered']
    %10 = vsyncpa [#allocation3], 0
    %11 = vsyncpa [#allocation6], 0
    %12 = vsyncpa [#allocation9], 0
    %13 = vsyncpa [#allocation4], 0
    // Predicated region
    $region2: #{tpu_custom_call.1} parent=1 // pred_check
      _
    $region3: #{tpu_custom_call.1} parent=1 // pred_check_branch
      %15 = sbr.rel (0) target = $region5
    $region4: #{tpu_custom_call.1} parent=1 // pred_region
      %s17 = ssub.s32 256, 256
      %18 = vsyncadd [#allocation3], %s17
      %s19 = sshll.u32 [#allocation2], 4
      %s20 = int_to_ptr.vmem [resolvable:$true] %s19
      %25 = dma.hbm_to_vmem [thread:$0]  %s0, 256, %s20, [#allocation3], 128, 128, 8
    $region5: #{tpu_custom_call.1} parent=1 // pred_fallthru
      _
    // Predicated region
    $region6: #{tpu_custom_call.1} parent=1 // pred_check
      _
    $region7: #{tpu_custom_call.1} parent=1 // pred_check_branch
      %27 = sbr.rel (0) target = $region9
    $region8: #{tpu_custom_call.1} parent=1 // pred_region
      %s29 = ssub.s32 1024, 1024
      %30 = vsyncadd [#allocation6], %s29
      %s31 = sshll.u32 [#allocation5], 4
      %s32 = int_to_ptr.vmem [resolvable:$true] %s31
      %37 = dma.hbm_to_vmem [thread:$0]  %s1, 1024, %s32, [#allocation6], 128, 128, 8
    $region9: #{tpu_custom_call.1} parent=1 // pred_fallthru
      _
    // Predicated region
    $region10: #{tpu_custom_call.1} parent=1 // pred_check
      _
    $region11: #{tpu_custom_call.1} parent=1 // pred_check_branch
      %39 = sbr.rel (0) target = $region13
    $region12: #{tpu_custom_call.1} parent=1 // pred_region
      %s41 = ssub.s32 512, 512
      %42 = vsyncadd [#allocation6], %s41
      %s43 = sshll.u32 [#allocation7], 4
      %s44 = int_to_ptr.vmem [resolvable:$true] %s43
      %49 = dma.hbm_to_vmem [thread:$0]  %s2, 512, %s44, [#allocation6], 128, 128, 8
    $region13: #{tpu_custom_call.1} parent=1 // pred_fallthru
      _
    // Predicated region
    $region14: #{tpu_custom_call.1} parent=1 // pred_check
      _
    $region15: #{tpu_custom_call.1} parent=1 // pred_check_branch
      %51 = sbr.rel (0) target = $region17
    $region16: #{tpu_custom_call.1} parent=1 // pred_region
      %s53 = ssub.s32 1536, 1536
      %54 = vsyncadd [#allocation9], %s53
      %s55 = sshll.u32 [#allocation8], 4
      %s56 = int_to_ptr.vmem [resolvable:$true] %s55
      %61 = dma.hbm_to_vmem [thread:$0]  %s3, 1536, %s56, [#allocation9], 128, 128, 8
    $region17: #{tpu_custom_call.1} parent=1 // pred_fallthru
      _
    // Predicated region
    $region18: #{tpu_custom_call.1} parent=1 // pred_check
      _
    $region19: #{tpu_custom_call.1} parent=1 // pred_check_branch
      %63 = sbr.rel (0) target = $region21
    $region20: #{tpu_custom_call.1} parent=1 // pred_region
      %s65 = ssub.s32 128, 128
      %66 = vsyncadd [#allocation9], %s65
      %s68 = sshll.u32 [#allocation10], 4
      %s69 = int_to_ptr.vmem [resolvable:$true] %s68
      %71 = dma.hbm_to_vmem [thread:$0]  %s4, 128, %s69, [#allocation9]
    $region21: #{tpu_custom_call.1} parent=1 // pred_fallthru
      _
    // Predicated region
    $region22: #{tpu_custom_call.1} parent=1 // pred_check
      _
    $region23: #{tpu_custom_call.1} parent=1 // pred_check_branch
      %73 = sbr.rel (0) target = $region25
    $region24: #{tpu_custom_call.1} parent=1 // pred_region
      %74 = dma.done [#allocation3], 256
    $region25: #{tpu_custom_call.1} parent=1 // pred_fallthru
      _
    // Predicated region
    $region26: #{tpu_custom_call.1} parent=1 // pred_check
      _
    $region27: #{tpu_custom_call.1} parent=1 // pred_check_branch
      %76 = sbr.rel (0) target = $region29
    $region28: #{tpu_custom_call.1} parent=1 // pred_region
      %77 = dma.done [#allocation6], 1024
    $region29: #{tpu_custom_call.1} parent=1 // pred_fallthru
      _
    // Predicated region
    $region30: #{tpu_custom_call.1} parent=1 // pred_check
      _
    $region31: #{tpu_custom_call.1} parent=1 // pred_check_branch
      %79 = sbr.rel (0) target = $region33
    $region32: #{tpu_custom_call.1} parent=1 // pred_region
      %80 = dma.done [#allocation6], 512
    $region33: #{tpu_custom_call.1} parent=1 // pred_fallthru
      _
    // Predicated region
    $region34: #{tpu_custom_call.1} parent=1 // pred_check
      _
    $region35: #{tpu_custom_call.1} parent=1 // pred_check_branch
      %82 = sbr.rel (0) target = $region37
    $region36: #{tpu_custom_call.1} parent=1 // pred_region
      %83 = dma.done [#allocation9], 1536
    $region37: #{tpu_custom_call.1} parent=1 // pred_fallthru
      _
    // Predicated region
    $region38: #{tpu_custom_call.1} parent=1 // pred_check
      _
    $region39: #{tpu_custom_call.1} parent=1 // pred_check_branch
      %85 = sbr.rel (0) target = $region41
    $region40: #{tpu_custom_call.1} parent=1 // pred_region
      %86 = dma.done [#allocation9], 128
    $region41: #{tpu_custom_call.1} parent=1 // pred_fallthru
      _
    %v87 = vld [vmem:[#allocation2] sm:$0xff]
    %v88 = vld [vmem:[#allocation2 + $0x8] sm:$0xff]
    %v89 = vld [vmem:[#allocation10] sm:$0xff]
    %v90 = vld [vmem:[#allocation8] sm:$0xff]
    %v91 = vld [vmem:[#allocation8 + $0x8] sm:$0xff]
    %v92 = vld [vmem:[#allocation8 + $0x10] sm:$0xff]
    %v93 = vld [vmem:[#allocation8 + $0x18] sm:$0xff]
    %v94 = vld [vmem:[#allocation8 + $0x20] sm:$0xff]
    %v95 = vld [vmem:[#allocation8 + $0x28] sm:$0xff]
    %v96 = vld [vmem:[#allocation8 + $0x30] sm:$0xff]
    %v97 = vld [vmem:[#allocation8 + $0x38] sm:$0xff]
    %v98 = vld [vmem:[#allocation8 + $0x40] sm:$0xff]
    %v99 = vld [vmem:[#allocation8 + $0x48] sm:$0xff]
    %v100 = vld [vmem:[#allocation8 + $0x50] sm:$0xff]
    %v101 = vld [vmem:[#allocation8 + $0x58] sm:$0xff]
    %vm102 = vcmask 261120
    %v103 = vsel %vm102, %v87, 0.0
    %104 = vadd.xlane.f32.xlu0 %v103
    %v105 = vpop.xlane.xlu0 %104
    %v106 = vsel %vm102, %v88, 0.0
    %107 = vadd.xlane.f32.xlu0 %v106
    %v108 = vpop.xlane.xlu0 %107
    %v109 = vrcp.pop 32.0
    %v110 = vmul.f32 %v105, %v109
    %v111 = vmul.f32 %v108, %v109
    %v112 = vsub.f32 %v87, %v110
    %v113 = vsub.f32 %v88, %v111
    %v114 = vmul.f32 %v112, %v112
    %v115 = vmul.f32 %v113, %v113
    %v116 = vsel %vm102, %v114, 0.0
    %117 = vadd.xlane.f32.xlu0 %v116
    %v118 = vpop.xlane.xlu0 %117
    %v119 = vsel %vm102, %v115, 0.0
    %120 = vadd.xlane.f32.xlu0 %v119
    %v121 = vpop.xlane.xlu0 %120
    %v122 = vmul.f32 %v118, 0.032258064
    %v123 = vmul.f32 %v121, 0.032258064
    %v124 = vrsqrt.pop %v122
    %v125 = vmul.f32 %v122, %v124
    %vm126 = vcmp.eq.f32.partialorder %v122, inf
    %v127 = vsel %vm126, %v122, %v125
    %vm128 = vcmp.eq.f32.partialorder %v122, 0.0
    %v129 = vand.u32 %v122, 2147483648
    %v130 = vsel %vm128, %v129, %v127
    %v131 = vrsqrt.pop %v123
    %v132 = vmul.f32 %v123, %v131
    %vm133 = vcmp.eq.f32.partialorder %v123, inf
    %v134 = vsel %vm133, %v123, %v132
    %vm135 = vcmp.eq.f32.partialorder %v123, 0.0
    %v136 = vand.u32 %v123, 2147483648
    %v137 = vsel %vm135, %v136, %v134
    %v138 = vadd.f32 %v130, 1e-06
    %v139 = vadd.f32 %v137, 1e-06
    %v140 = vrcp.pop %v138
    %v141 = vmul.f32 1.0, %v140
    %v142 = vrcp.pop %v139
    %v143 = vmul.f32 1.0, %v142
    %v144 = vmul.f32 %v112, %v141
    %v145 = vmul.f32 %v113, %v143
    %v146 = vlaneseq
    %v147 = vshrl.u32 %v146, 7
    %v148 = vsub.s32 0, %v147
    %v149 = vrot.slane %v89, %v148
    %v150 = vmul.f32 %v149, %v144
    %v151 = vmul.f32 %v149, %v145
    %v152 = vlaneseq
    %v153 = vshrl.u32 %v152, 7
    %v154 = vsub.s32 1, %v153
    %v155 = vrot.slane %v89, %v154
    %v156 = vadd.f32 %v150, %v155
    %v157 = vadd.f32 %v151, %v155
    %v158 = vld [vmem:[#allocation7] sm:$0xff]
    %v159 = vld [vmem:[#allocation7 + $0x8] sm:$0xff]
    %v160 = vld [vmem:[#allocation7 + $0x10] sm:$0xff]
    %v161 = vld [vmem:[#allocation7 + $0x18] sm:$0xff]
    %v162 = vlaneseq
    %v163 = vshrl.u32 %v162, 7
    %v164 = vsub.s32 4, %v163
    %v165 = vrot.slane %v89, %v164
    %v167 = vsel %vm102, %v156, 0
    %v170 = vsel %vm102, %v157, 0
    %172 = vmatprep.subr.mxu0 0.0
    %173 = vmatpush1.msra.mxu0 0.0
    %174 = vmatprep.subr.mxu0 0.0
    %175 = vmatpush1.msra.mxu0 0.0
    %176 = vmatprep.subr.mxu0 0.0
    %177 = vmatpush1.msra.mxu0 0.0
    %178 = vmatprep.subr.mxu0 0.0
    %179 = vmatpush1.msra.mxu0 0.0
    %180 = vmatprep.subr.mxu0 0.0
    %181 = vmatpush1.msra.mxu0 0.0
    %182 = vmatprep.subr.mxu0 0.0
    %183 = vmatpush1.msra.mxu0 0.0
    %184 = vmatprep.subr.mxu0 0.0
    %185 = vmatpush1.msra.mxu0 0.0
    %186 = vmatprep.subr.mxu0 0.0
    %187 = vmatpush1.msra.mxu0 0.0
    %188 = vmatprep.subr.mxu0 0.0
    %189 = vmatpush1.msra.mxu0 0.0
    %190 = vmatprep.subr.mxu0 0.0
    %191 = vmatpush1.msra.mxu0 0.0
    %192 = vmatprep.subr.mxu0 0.0
    %193 = vmatpush1.msra.mxu0 0.0
    %194 = vmatprep.subr.mxu0 0.0
    %195 = vmatpush1.msra.mxu0 0.0
    %196 = vmatprep.subr.mxu0 0.0
    %197 = vmatpush1.msra.mxu0 %v161
    %198 = vmatprep.subr.mxu0 0.0
    %199 = vmatpush1.msra.mxu0 %v160
    %200 = vmatprep.subr.mxu0 0.0
    %201 = vmatpush1.msra.mxu0 %v159
    %202 = vmatprep.subr.mxu0 0.0
    %203 = vmatpush1.msra.mxu0 %v158
    %204 = vmatprep.subr.mxu0 0.0
    %205 = vmatpush2.msra.mxu0 0.0
    %206 = vmatprep.subr.mxu0 0.0
    %207 = vmatpush2.msra.mxu0 0.0
    %208 = vmatprep.subr.mxu0 0.0
    %209 = vmatpush2.msra.mxu0 0.0
    %210 = vmatprep.subr.mxu0 0.0
    %211 = vmatpush2.msra.mxu0 0.0
    %212 = vmatprep.subr.mxu0 0.0
    %213 = vmatpush2.msra.mxu0 0.0
    %214 = vmatprep.subr.mxu0 0.0
    %215 = vmatpush2.msra.mxu0 0.0
    %216 = vmatprep.subr.mxu0 0.0
    %217 = vmatpush2.msra.mxu0 0.0
    %218 = vmatprep.subr.mxu0 0.0
    %219 = vmatpush2.msra.mxu0 0.0
    %220 = vmatprep.subr.mxu0 0.0
    %221 = vmatpush2.msra.mxu0 0.0
    %222 = vmatprep.subr.mxu0 0.0
    %223 = vmatpush2.msra.mxu0 0.0
    %224 = vmatprep.subr.mxu0 0.0
    %225 = vmatpush2.msra.mxu0 0.0
    %226 = vmatprep.subr.mxu0 0.0
    %227 = vmatpush2.msra.mxu0 0.0
    %228 = vmatprep.subr.mxu0 0.0
    %229 = vmatpush2.msra.mxu0 0.0
    %230 = vmatprep.subr.mxu0 0.0
    %231 = vmatpush2.msra.mxu0 0.0
    %232 = vmatprep.subr.mxu0 0.0
    %233 = vmatpush2.msra.mxu0 0.0
    %234 = vmatprep.subr.mxu0 0.0
    %235 = vmatpush2.msra.mxu0 0.0
    %236 = vmatprep.mubr.f32.mxu0 0.0
    %237 = vmatmul.mubr.f32.gmra.mxu0 %v167
    %v238 = vpop.f32.mrf.mxu0
    %v239 = vadd.f32 %v165, %v238
    %v240 = vpop.f32.mrf.mxu0
    %241 = vmatprep.mubr.f32.mxu0 0.0
    %242 = vmatmul.mubr.f32.gmra.mxu0 %v170
    %v243 = vpop.f32.mrf.mxu0
    %v244 = vadd.f32 %v165, %v243
    %v245 = vpop.f32.mrf.mxu0
    %246 = vdwg.mxu0
    %249 = vrot.lane.b32.xlu0 %v239, 104
    %v250 = vpop.permute.xlu0 %249
    %251 = vrot.lane.b32.xlu0 %v244, 104
    %v252 = vpop.permute.xlu0 %251
    %253 = vrot.lane.b32.xlu0 %v239, 80
    %v254 = vpop.permute.xlu0 %253
    %255 = vrot.lane.b32.xlu0 %v244, 80
    %v256 = vpop.permute.xlu0 %255
    %257 = vrot.lane.b32.xlu0 %v239, 56
    %v258 = vpop.permute.xlu0 %257
    %259 = vrot.lane.b32.xlu0 %v244, 56
    %v260 = vpop.permute.xlu0 %259
    %261 = vrot.lane.b32.xlu0 %v239, 120
    %v262 = vpop.permute.xlu0 %261
    %263 = vrot.lane.b32.xlu0 %v244, 120
    %v264 = vpop.permute.xlu0 %263
    %265 = vrot.lane.b32.xlu0 %v250, 120
    %v266 = vpop.permute.xlu0 %265
    %267 = vrot.lane.b32.xlu0 %v252, 120
    %v268 = vpop.permute.xlu0 %267
    %269 = vrot.lane.b32.xlu0 %v254, 120
    %v270 = vpop.permute.xlu0 %269
    %271 = vrot.lane.b32.xlu0 %v256, 120
    %v272 = vpop.permute.xlu0 %271
    %273 = vrot.lane.b32.xlu0 %v258, 120
    %v274 = vpop.permute.xlu0 %273
    %275 = vrot.lane.b32.xlu0 %v260, 120
    %v276 = vpop.permute.xlu0 %275
    %vm277 = vcmask 64512
    %v278 = vsel %vm277, %v239, 0
    %v280 = vsel %vm277, %v244, 0
    %v282 = vsel %vm277, %v250, 0
    %v284 = vsel %vm277, %v252, 0
    %v286 = vsel %vm277, %v254, 0
    %v288 = vsel %vm277, %v256, 0
    %v290 = vsel %vm277, %v258, 0
    %v292 = vsel %vm277, %v260, 0
    %v294 = vsel %vm277, %v262, 0
    %v296 = vsel %vm277, %v264, 0
    %v298 = vsel %vm277, %v266, 0
    %v300 = vsel %vm277, %v268, 0
    %v302 = vsel %vm277, %v270, 0
    %v304 = vsel %vm277, %v272, 0
    %v306 = vsel %vm277, %v274, 0
    %v308 = vsel %vm277, %v276, 0
    %310 = vmatprep.subr.mxu0 0.0
    %311 = vmatpush1.xpose.msra.mxu0 0.0
    %312 = vmatprep.subr.mxu0 0.0
    %313 = vmatpush1.xpose.msra.mxu0 0.0
    %314 = vmatprep.subr.mxu0 0.0
    %315 = vmatpush1.xpose.msra.mxu0 0.0
    %316 = vmatprep.subr.mxu0 0.0
    %317 = vmatpush1.xpose.msra.mxu0 0.0
    %318 = vmatprep.subr.mxu0 0.0
    %319 = vmatpush1.xpose.msra.mxu0 0.0
    %320 = vmatprep.subr.mxu0 0.0
    %321 = vmatpush1.xpose.msra.mxu0 0.0
    %322 = vmatprep.subr.mxu0 0.0
    %323 = vmatpush1.xpose.msra.mxu0 0.0
    %324 = vmatprep.subr.mxu0 0.0
    %325 = vmatpush1.xpose.msra.mxu0 0.0
    %326 = vmatprep.subr.mxu0 0.0
    %327 = vmatpush1.xpose.msra.mxu0 %v308
    %328 = vmatprep.subr.mxu0 0.0
    %329 = vmatpush1.xpose.msra.mxu0 %v306
    %330 = vmatprep.subr.mxu0 0.0
    %331 = vmatpush1.xpose.msra.mxu0 %v304
    %332 = vmatprep.subr.mxu0 0.0
    %333 = vmatpush1.xpose.msra.mxu0 %v302
    %334 = vmatprep.subr.mxu0 0.0
    %335 = vmatpush1.xpose.msra.mxu0 %v300
    %336 = vmatprep.subr.mxu0 0.0
    %337 = vmatpush1.xpose.msra.mxu0 %v298
    %338 = vmatprep.subr.mxu0 0.0
    %339 = vmatpush1.xpose.msra.mxu0 %v296
    %340 = vmatprep.subr.mxu0 0.0
    %341 = vmatpush1.xpose.msra.mxu0 %v294
    %342 = vmatprep.subr.mxu0 0.0
    %343 = vmatpush2.xpose.msra.mxu0 0.0
    %344 = vmatprep.subr.mxu0 0.0
    %345 = vmatpush2.xpose.msra.mxu0 0.0
    %346 = vmatprep.subr.mxu0 0.0
    %347 = vmatpush2.xpose.msra.mxu0 0.0
    %348 = vmatprep.subr.mxu0 0.0
    %349 = vmatpush2.xpose.msra.mxu0 0.0
    %350 = vmatprep.subr.mxu0 0.0
    %351 = vmatpush2.xpose.msra.mxu0 0.0
    %352 = vmatprep.subr.mxu0 0.0
    %353 = vmatpush2.xpose.msra.mxu0 0.0
    %354 = vmatprep.subr.mxu0 0.0
    %355 = vmatpush2.xpose.msra.mxu0 0.0
    %356 = vmatprep.subr.mxu0 0.0
    %357 = vmatpush2.xpose.msra.mxu0 0.0
    %358 = vmatprep.subr.mxu0 0.0
    %359 = vmatpush2.xpose.msra.mxu0 0.0
    %360 = vmatprep.subr.mxu0 0.0
    %361 = vmatpush2.xpose.msra.mxu0 0.0
    %362 = vmatprep.subr.mxu0 0.0
    %363 = vmatpush2.xpose.msra.mxu0 0.0
    %364 = vmatprep.subr.mxu0 0.0
    %365 = vmatpush2.xpose.msra.mxu0 0.0
    %366 = vmatprep.subr.mxu0 0.0
    %367 = vmatpush2.xpose.msra.mxu0 0.0
    %368 = vmatprep.subr.mxu0 0.0
    %369 = vmatpush2.xpose.msra.mxu0 0.0
    %370 = vmatprep.subr.mxu0 0.0
    %371 = vmatpush2.xpose.msra.mxu0 0.0
    %372 = vmatprep.subr.mxu0 0.0
    %373 = vmatpush2.xpose.msra.mxu0 0.0
    %374 = vmatprep.mubr.f32.mxu0 0.0
    %375 = vmatmul.mubr.f32.gmra.mxu0 %v278
    %v376 = vpop.f32.mrf.mxu0
    %v377 = vadd.f32 0.0, %v376
    %v378 = vpop.f32.mrf.mxu0
    %379 = vmatprep.mubr.f32.mxu0 0.0
    %380 = vmatmul.mubr.f32.gmra.mxu0 %v280
    %v381 = vpop.f32.mrf.mxu0
    %v382 = vadd.f32 0.0, %v381
    %v383 = vpop.f32.mrf.mxu0
    %384 = vmatprep.mubr.f32.mxu0 0.0
    %385 = vmatmul.mubr.f32.gmra.mxu0 %v282
    %v386 = vpop.f32.mrf.mxu0
    %v387 = vadd.f32 0.0, %v386
    %v388 = vpop.f32.mrf.mxu0
    %389 = vmatprep.mubr.f32.mxu0 0.0
    %390 = vmatmul.mubr.f32.gmra.mxu0 %v284
    %v391 = vpop.f32.mrf.mxu0
    %v392 = vadd.f32 0.0, %v391
    %v393 = vpop.f32.mrf.mxu0
    %394 = vmatprep.mubr.f32.mxu0 0.0
    %395 = vmatmul.mubr.f32.gmra.mxu0 %v286
    %v396 = vpop.f32.mrf.mxu0
    %v397 = vadd.f32 0.0, %v396
    %v398 = vpop.f32.mrf.mxu0
    %399 = vmatprep.mubr.f32.mxu0 0.0
    %400 = vmatmul.mubr.f32.gmra.mxu0 %v288
    %v401 = vpop.f32.mrf.mxu0
    %v402 = vadd.f32 0.0, %v401
    %v403 = vpop.f32.mrf.mxu0
    %404 = vmatprep.mubr.f32.mxu0 0.0
    %405 = vmatmul.mubr.f32.gmra.mxu0 %v290
    %v406 = vpop.f32.mrf.mxu0
    %v407 = vadd.f32 0.0, %v406
    %v408 = vpop.f32.mrf.mxu0
    %409 = vmatprep.mubr.f32.mxu0 0.0
    %410 = vmatmul.mubr.f32.gmra.mxu0 %v292
    %v411 = vpop.f32.mrf.mxu0
    %v412 = vadd.f32 0.0, %v411
    %v413 = vpop.f32.mrf.mxu0
    %414 = vdwg.mxu0
    %v415 = vmul.f32 %v377, 0.35355338
    %v416 = vmul.f32 %v382, 0.35355338
    %v417 = vmul.f32 %v387, 0.35355338
    %v418 = vmul.f32 %v392, 0.35355338
    %v419 = vmul.f32 %v397, 0.35355338
    %v420 = vmul.f32 %v402, 0.35355338
    %v421 = vmul.f32 %v407, 0.35355338
    %v422 = vmul.f32 %v412, 0.35355338
    %v423 = vld [vmem:[#allocation5] sm:$0xff]
    %v424 = vld [vmem:[#allocation5 + $0x8] sm:$0xff]
    %v425 = vld [vmem:[#allocation5 + $0x10] sm:$0xff]
    %v426 = vld [vmem:[#allocation5 + $0x18] sm:$0xff]
    %v427 = vld [vmem:[#allocation5 + $0x20] sm:$0xff]
    %v428 = vld [vmem:[#allocation5 + $0x28] sm:$0xff]
    %v429 = vld [vmem:[#allocation5 + $0x30] sm:$0xff]
    %v430 = vld [vmem:[#allocation5 + $0x38] sm:$0xff]
    %v431 = vadd.f32 %v415, %v423
    %v432 = vadd.f32 %v416, %v424
    %v433 = vadd.f32 %v417, %v425
    %v434 = vadd.f32 %v418, %v426
    %v435 = vadd.f32 %v419, %v427
    %v436 = vadd.f32 %v420, %v428
    %v437 = vadd.f32 %v421, %v429
    %v438 = vadd.f32 %v422, %v430
    %vm439 = vcmask 523264
    %v440 = vsel %vm439, %v431, -inf
    %441 = vmax.xlane.f32.xlu0 %v440
    %v442 = vpop.xlane.xlu0 %441
    %v443 = vsel %vm439, %v432, -inf
    %444 = vmax.xlane.f32.xlu0 %v443
    %v445 = vpop.xlane.xlu0 %444
    %v446 = vsel %vm439, %v433, -inf
    %447 = vmax.xlane.f32.xlu0 %v446
    %v448 = vpop.xlane.xlu0 %447
    %v449 = vsel %vm439, %v434, -inf
    %450 = vmax.xlane.f32.xlu0 %v449
    %v451 = vpop.xlane.xlu0 %450
    %v452 = vsel %vm439, %v435, -inf
    %453 = vmax.xlane.f32.xlu0 %v452
    %v454 = vpop.xlane.xlu0 %453
    %v455 = vsel %vm439, %v436, -inf
    %456 = vmax.xlane.f32.xlu0 %v455
    %v457 = vpop.xlane.xlu0 %456
    %v458 = vsel %vm439, %v437, -inf
    %459 = vmax.xlane.f32.xlu0 %v458
    %v460 = vpop.xlane.xlu0 %459
    %v461 = vsel %vm439, %v438, -inf
    %462 = vmax.xlane.f32.xlu0 %v461
    %v463 = vpop.xlane.xlu0 %462
    %v464 = vsub.f32 %v431, %v442
    %v465 = vsub.f32 %v432, %v445
    %v466 = vsub.f32 %v433, %v448
    %v467 = vsub.f32 %v434, %v451
    %v468 = vsub.f32 %v435, %v454
    %v469 = vsub.f32 %v436, %v457
    %v470 = vsub.f32 %v437, %v460
    %v471 = vsub.f32 %v438, %v463
    %v472 = vmul.f32 %v464, 1.442695
    %v473 = vpow.pop %v472
    %v474 = vmul.f32 %v465, 1.442695
    %v475 = vpow.pop %v474
    %v476 = vmul.f32 %v466, 1.442695
    %v477 = vpow.pop %v476
    %v478 = vmul.f32 %v467, 1.442695
    %v479 = vpow.pop %v478
    %v480 = vmul.f32 %v468, 1.442695
    %v481 = vpow.pop %v480
    %v482 = vmul.f32 %v469, 1.442695
    %v483 = vpow.pop %v482
    %v484 = vmul.f32 %v470, 1.442695
    %v485 = vpow.pop %v484
    %v486 = vmul.f32 %v471, 1.442695
    %v487 = vpow.pop %v486
    %v488 = vsel %vm439, %v473, 0.0
    %489 = vadd.xlane.f32.xlu0 %v488
    %v490 = vpop.xlane.xlu0 %489
    %v491 = vsel %vm439, %v475, 0.0
    %492 = vadd.xlane.f32.xlu0 %v491
    %v493 = vpop.xlane.xlu0 %492
    %v494 = vsel %vm439, %v477, 0.0
    %495 = vadd.xlane.f32.xlu0 %v494
    %v496 = vpop.xlane.xlu0 %495
    %v497 = vsel %vm439, %v479, 0.0
    %498 = vadd.xlane.f32.xlu0 %v497
    %v499 = vpop.xlane.xlu0 %498
    %v500 = vsel %vm439, %v481, 0.0
    %501 = vadd.xlane.f32.xlu0 %v500
    %v502 = vpop.xlane.xlu0 %501
    %v503 = vsel %vm439, %v483, 0.0
    %504 = vadd.xlane.f32.xlu0 %v503
    %v505 = vpop.xlane.xlu0 %504
    %v506 = vsel %vm439, %v485, 0.0
    %507 = vadd.xlane.f32.xlu0 %v506
    %v508 = vpop.xlane.xlu0 %507
    %v509 = vsel %vm439, %v487, 0.0
    %510 = vadd.xlane.f32.xlu0 %v509
    %v511 = vpop.xlane.xlu0 %510
    %512 = vrot.lane.b32.xlu0 %v239, 112
    %v513 = vpop.permute.xlu0 %512
    %514 = vrot.lane.b32.xlu0 %v244, 112
    %v515 = vpop.permute.xlu0 %514
    %516 = vrot.lane.b32.xlu0 %v250, 112
    %v517 = vpop.permute.xlu0 %516
    %518 = vrot.lane.b32.xlu0 %v252, 112
    %v519 = vpop.permute.xlu0 %518
    %520 = vrot.lane.b32.xlu0 %v254, 112
    %v521 = vpop.permute.xlu0 %520
    %522 = vrot.lane.b32.xlu0 %v256, 112
    %v523 = vpop.permute.xlu0 %522
    %524 = vrot.lane.b32.xlu0 %v258, 112
    %v525 = vpop.permute.xlu0 %524
    %526 = vrot.lane.b32.xlu0 %v260, 112
    %v527 = vpop.permute.xlu0 %526
    %v537 = vsel %vm439, %v473, 0
    %v540 = vsel %vm439, %v475, 0
    %v543 = vsel %vm439, %v477, 0
    %v546 = vsel %vm439, %v479, 0
    %v549 = vsel %vm439, %v481, 0
    %v552 = vsel %vm439, %v483, 0
    %v555 = vsel %vm439, %v485, 0
    %v558 = vsel %vm439, %v487, 0
    %560 = vmatprep.subr.mxu0 0.0
    %561 = vmatpush1.msra.mxu0 0.0
    %562 = vmatprep.subr.mxu0 0.0
    %563 = vmatpush1.msra.mxu0 0.0
    %564 = vmatprep.subr.mxu0 0.0
    %565 = vmatpush1.msra.mxu0 0.0
    %566 = vmatprep.subr.mxu0 0.0
    %567 = vmatpush1.msra.mxu0 0.0
    %568 = vmatprep.subr.mxu0 0.0
    %569 = vmatpush1.msra.mxu0 0.0
    %570 = vmatprep.subr.mxu0 0.0
    %571 = vmatpush1.msra.mxu0 0.0
    %572 = vmatprep.subr.mxu0 0.0
    %573 = vmatpush1.msra.mxu0 0.0
    %574 = vmatprep.subr.mxu0 0.0
    %575 = vmatpush1.msra.mxu0 0.0
    %576 = vmatprep.subr.mxu0 0.0
    %577 = vmatpush1.msra.mxu0 %v527
    %578 = vmatprep.subr.mxu0 0.0
    %579 = vmatpush1.msra.mxu0 %v525
    %580 = vmatprep.subr.mxu0 0.0
    %581 = vmatpush1.msra.mxu0 %v523
    %582 = vmatprep.subr.mxu0 0.0
    %583 = vmatpush1.msra.mxu0 %v521
    %584 = vmatprep.subr.mxu0 0.0
    %585 = vmatpush1.msra.mxu0 %v519
    %586 = vmatprep.subr.mxu0 0.0
    %587 = vmatpush1.msra.mxu0 %v517
    %588 = vmatprep.subr.mxu0 0.0
    %589 = vmatpush1.msra.mxu0 %v515
    %590 = vmatprep.subr.mxu0 0.0
    %591 = vmatpush1.msra.mxu0 %v513
    %592 = vmatprep.subr.mxu0 0.0
    %593 = vmatpush2.msra.mxu0 0.0
    %594 = vmatprep.subr.mxu0 0.0
    %595 = vmatpush2.msra.mxu0 0.0
    %596 = vmatprep.subr.mxu0 0.0
    %597 = vmatpush2.msra.mxu0 0.0
    %598 = vmatprep.subr.mxu0 0.0
    %599 = vmatpush2.msra.mxu0 0.0
    %600 = vmatprep.subr.mxu0 0.0
    %601 = vmatpush2.msra.mxu0 0.0
    %602 = vmatprep.subr.mxu0 0.0
    %603 = vmatpush2.msra.mxu0 0.0
    %604 = vmatprep.subr.mxu0 0.0
    %605 = vmatpush2.msra.mxu0 0.0
    %606 = vmatprep.subr.mxu0 0.0
    %607 = vmatpush2.msra.mxu0 0.0
    %608 = vmatprep.subr.mxu0 0.0
    %609 = vmatpush2.msra.mxu0 0.0
    %610 = vmatprep.subr.mxu0 0.0
    %611 = vmatpush2.msra.mxu0 0.0
    %612 = vmatprep.subr.mxu0 0.0
    %613 = vmatpush2.msra.mxu0 0.0
    %614 = vmatprep.subr.mxu0 0.0
    %615 = vmatpush2.msra.mxu0 0.0
    %616 = vmatprep.subr.mxu0 0.0
    %617 = vmatpush2.msra.mxu0 0.0
    %618 = vmatprep.subr.mxu0 0.0
    %619 = vmatpush2.msra.mxu0 0.0
    %620 = vmatprep.subr.mxu0 0.0
    %621 = vmatpush2.msra.mxu0 0.0
    %622 = vmatprep.subr.mxu0 0.0
    %623 = vmatpush2.msra.mxu0 0.0
    %624 = vmatprep.mubr.f32.mxu0 0.0
    %625 = vmatmul.mubr.f32.gmra.mxu0 %v537
    %v626 = vpop.f32.mrf.mxu0
    %v627 = vadd.f32 0.0, %v626
    %v628 = vpop.f32.mrf.mxu0
    %629 = vmatprep.mubr.f32.mxu0 0.0
    %630 = vmatmul.mubr.f32.gmra.mxu0 %v540
    %v631 = vpop.f32.mrf.mxu0
    %v632 = vadd.f32 0.0, %v631
    %v633 = vpop.f32.mrf.mxu0
    %634 = vmatprep.mubr.f32.mxu0 0.0
    %635 = vmatmul.mubr.f32.gmra.mxu0 %v543
    %v636 = vpop.f32.mrf.mxu0
    %v637 = vadd.f32 0.0, %v636
    %v638 = vpop.f32.mrf.mxu0
    %639 = vmatprep.mubr.f32.mxu0 0.0
    %640 = vmatmul.mubr.f32.gmra.mxu0 %v546
    %v641 = vpop.f32.mrf.mxu0
    %v642 = vadd.f32 0.0, %v641
    %v643 = vpop.f32.mrf.mxu0
    %644 = vmatprep.mubr.f32.mxu0 0.0
    %645 = vmatmul.mubr.f32.gmra.mxu0 %v549
    %v646 = vpop.f32.mrf.mxu0
    %v647 = vadd.f32 0.0, %v646
    %v648 = vpop.f32.mrf.mxu0
    %649 = vmatprep.mubr.f32.mxu0 0.0
    %650 = vmatmul.mubr.f32.gmra.mxu0 %v552
    %v651 = vpop.f32.mrf.mxu0
    %v652 = vadd.f32 0.0, %v651
    %v653 = vpop.f32.mrf.mxu0
    %654 = vmatprep.mubr.f32.mxu0 0.0
    %655 = vmatmul.mubr.f32.gmra.mxu0 %v555
    %v656 = vpop.f32.mrf.mxu0
    %v657 = vadd.f32 0.0, %v656
    %v658 = vpop.f32.mrf.mxu0
    %659 = vmatprep.mubr.f32.mxu0 0.0
    %660 = vmatmul.mubr.f32.gmra.mxu0 %v558
    %v661 = vpop.f32.mrf.mxu0
    %v662 = vadd.f32 0.0, %v661
    %v663 = vpop.f32.mrf.mxu0
    %664 = vdwg.mxu0
    %v665 = vrcp.pop %v490
    %v666 = vmul.f32 1.0, %v665
    %v667 = vrcp.pop %v493
    %v668 = vmul.f32 1.0, %v667
    %v669 = vrcp.pop %v496
    %v670 = vmul.f32 1.0, %v669
    %v671 = vrcp.pop %v499
    %v672 = vmul.f32 1.0, %v671
    %v673 = vrcp.pop %v502
    %v674 = vmul.f32 1.0, %v673
    %v675 = vrcp.pop %v505
    %v676 = vmul.f32 1.0, %v675
    %v677 = vrcp.pop %v508
    %v678 = vmul.f32 1.0, %v677
    %v679 = vrcp.pop %v511
    %v680 = vmul.f32 1.0, %v679
    %v681 = vmul.f32 %v627, %v666
    %v682 = vmul.f32 %v632, %v668
    %v683 = vmul.f32 %v637, %v670
    %v684 = vmul.f32 %v642, %v672
    %v685 = vmul.f32 %v647, %v674
    %v686 = vmul.f32 %v652, %v676
    %v687 = vmul.f32 %v657, %v678
    %v688 = vmul.f32 %v662, %v680
    %691 = vrot.lane.b32.xlu0 %v683, 8
    %v692 = vpop.permute.xlu0 %691
    %693 = vrot.lane.b32.xlu0 %v684, 8
    %v694 = vpop.permute.xlu0 %693
    %699 = vrot.lane.b32.xlu0 %v685, 16
    %v700 = vpop.permute.xlu0 %699
    %701 = vrot.lane.b32.xlu0 %v686, 16
    %v702 = vpop.permute.xlu0 %701
    %707 = vrot.lane.b32.xlu0 %v687, 24
    %v708 = vpop.permute.xlu0 %707
    %709 = vrot.lane.b32.xlu0 %v688, 24
    %v710 = vpop.permute.xlu0 %709
    %v713 = vsel %vm277, %v681, %v692
    %v714 = vsel %vm277, %v682, %v694
    %vm715 = vcmask 130048
    %v716 = vsel %vm715, %v713, %v700
    %v717 = vsel %vm715, %v714, %v702
    %vm718 = vcmask 195584
    %v719 = vsel %vm718, %v716, %v708
    %v720 = vsel %vm718, %v717, %v710
    %v721 = vlaneseq
    %v722 = vshrl.u32 %v721, 7
    %v723 = vsub.s32 5, %v722
    %v724 = vrot.slane %v89, %v723
    %v726 = vsel %vm102, %v719, 0
    %v729 = vsel %vm102, %v720, 0
    %731 = vmatprep.subr.mxu0 0.0
    %732 = vmatpush1.msra.mxu0 0.0
    %733 = vmatprep.subr.mxu0 0.0
    %734 = vmatpush1.msra.mxu0 0.0
    %735 = vmatprep.subr.mxu0 0.0
    %736 = vmatpush1.msra.mxu0 0.0
    %737 = vmatprep.subr.mxu0 0.0
    %738 = vmatpush1.msra.mxu0 0.0
    %739 = vmatprep.subr.mxu0 0.0
    %740 = vmatpush1.msra.mxu0 0.0
    %741 = vmatprep.subr.mxu0 0.0
    %742 = vmatpush1.msra.mxu0 0.0
    %743 = vmatprep.subr.mxu0 0.0
    %744 = vmatpush1.msra.mxu0 0.0
    %745 = vmatprep.subr.mxu0 0.0
    %746 = vmatpush1.msra.mxu0 0.0
    %747 = vmatprep.subr.mxu0 0.0
    %748 = vmatpush1.msra.mxu0 0.0
    %749 = vmatprep.subr.mxu0 0.0
    %750 = vmatpush1.msra.mxu0 0.0
    %751 = vmatprep.subr.mxu0 0.0
    %752 = vmatpush1.msra.mxu0 0.0
    %753 = vmatprep.subr.mxu0 0.0
    %754 = vmatpush1.msra.mxu0 0.0
    %755 = vmatprep.subr.mxu0 0.0
    %756 = vmatpush1.msra.mxu0 %v93
    %757 = vmatprep.subr.mxu0 0.0
    %758 = vmatpush1.msra.mxu0 %v92
    %759 = vmatprep.subr.mxu0 0.0
    %760 = vmatpush1.msra.mxu0 %v91
    %761 = vmatprep.subr.mxu0 0.0
    %762 = vmatpush1.msra.mxu0 %v90
    %763 = vmatprep.subr.mxu0 0.0
    %764 = vmatpush2.msra.mxu0 0.0
    %765 = vmatprep.subr.mxu0 0.0
    %766 = vmatpush2.msra.mxu0 0.0
    %767 = vmatprep.subr.mxu0 0.0
    %768 = vmatpush2.msra.mxu0 0.0
    %769 = vmatprep.subr.mxu0 0.0
    %770 = vmatpush2.msra.mxu0 0.0
    %771 = vmatprep.subr.mxu0 0.0
    %772 = vmatpush2.msra.mxu0 0.0
    %773 = vmatprep.subr.mxu0 0.0
    %774 = vmatpush2.msra.mxu0 0.0
    %775 = vmatprep.subr.mxu0 0.0
    %776 = vmatpush2.msra.mxu0 0.0
    %777 = vmatprep.subr.mxu0 0.0
    %778 = vmatpush2.msra.mxu0 0.0
    %779 = vmatprep.subr.mxu0 0.0
    %780 = vmatpush2.msra.mxu0 0.0
    %781 = vmatprep.subr.mxu0 0.0
    %782 = vmatpush2.msra.mxu0 0.0
    %783 = vmatprep.subr.mxu0 0.0
    %784 = vmatpush2.msra.mxu0 0.0
    %785 = vmatprep.subr.mxu0 0.0
    %786 = vmatpush2.msra.mxu0 0.0
    %787 = vmatprep.subr.mxu0 0.0
    %788 = vmatpush2.msra.mxu0 0.0
    %789 = vmatprep.subr.mxu0 0.0
    %790 = vmatpush2.msra.mxu0 0.0
    %791 = vmatprep.subr.mxu0 0.0
    %792 = vmatpush2.msra.mxu0 0.0
    %793 = vmatprep.subr.mxu0 0.0
    %794 = vmatpush2.msra.mxu0 0.0
    %795 = vmatprep.mubr.f32.mxu0 0.0
    %796 = vmatmul.mubr.f32.gmra.mxu0 %v726
    %v797 = vpop.f32.mrf.mxu0
    %v798 = vadd.f32 %v724, %v797
    %v799 = vpop.f32.mrf.mxu0
    %800 = vmatprep.mubr.f32.mxu0 0.0
    %801 = vmatmul.mubr.f32.gmra.mxu0 %v729
    %v802 = vpop.f32.mrf.mxu0
    %v803 = vadd.f32 %v724, %v802
    %v804 = vpop.f32.mrf.mxu0
    %805 = vdwg.mxu0
    %v806 = vadd.f32 %v87, %v798
    %v807 = vadd.f32 %v88, %v803
    %v808 = vsel %vm102, %v806, 0.0
    %809 = vadd.xlane.f32.xlu0 %v808
    %v810 = vpop.xlane.xlu0 %809
    %v811 = vsel %vm102, %v807, 0.0
    %812 = vadd.xlane.f32.xlu0 %v811
    %v813 = vpop.xlane.xlu0 %812
    %v814 = vmul.f32 %v810, %v109
    %v815 = vmul.f32 %v813, %v109
    %v816 = vsub.f32 %v806, %v814
    %v817 = vsub.f32 %v807, %v815
    %v818 = vmul.f32 %v816, %v816
    %v819 = vmul.f32 %v817, %v817
    %v820 = vsel %vm102, %v818, 0.0
    %821 = vadd.xlane.f32.xlu0 %v820
    %v822 = vpop.xlane.xlu0 %821
    %v823 = vsel %vm102, %v819, 0.0
    %824 = vadd.xlane.f32.xlu0 %v823
    %v825 = vpop.xlane.xlu0 %824
    %v826 = vmul.f32 %v822, 0.032258064
    %v827 = vmul.f32 %v825, 0.032258064
    %v828 = vrsqrt.pop %v826
    %v829 = vmul.f32 %v826, %v828
    %vm830 = vcmp.eq.f32.partialorder %v826, inf
    %v831 = vsel %vm830, %v826, %v829
    %vm832 = vcmp.eq.f32.partialorder %v826, 0.0
    %v833 = vand.u32 %v826, 2147483648
    %v834 = vsel %vm832, %v833, %v831
    %v835 = vrsqrt.pop %v827
    %v836 = vmul.f32 %v827, %v835
    %vm837 = vcmp.eq.f32.partialorder %v827, inf
    %v838 = vsel %vm837, %v827, %v836
    %vm839 = vcmp.eq.f32.partialorder %v827, 0.0
    %v840 = vand.u32 %v827, 2147483648
    %v841 = vsel %vm839, %v840, %v838
    %v842 = vadd.f32 %v834, 1e-06
    %v843 = vadd.f32 %v841, 1e-06
    %v844 = vrcp.pop %v842
    %v845 = vmul.f32 1.0, %v844
    %v846 = vrcp.pop %v843
    %v847 = vmul.f32 1.0, %v846
    %v848 = vmul.f32 %v816, %v845
    %v849 = vmul.f32 %v817, %v847
    %v850 = vlaneseq
    %v851 = vshrl.u32 %v850, 7
    %v852 = vsub.s32 2, %v851
    %v853 = vrot.slane %v89, %v852
    %v854 = vmul.f32 %v853, %v848
    %v855 = vmul.f32 %v853, %v849
    %v856 = vlaneseq
    %v857 = vshrl.u32 %v856, 7
    %v858 = vsub.s32 3, %v857
    %v859 = vrot.slane %v89, %v858
    %v860 = vadd.f32 %v854, %v859
    %v861 = vadd.f32 %v855, %v859
    %v862 = vlaneseq
    %v863 = vshrl.u32 %v862, 7
    %v864 = vsub.s32 6, %v863
    %v865 = vrot.slane %v89, %v864
    %870 = vrot.lane.b32.xlu0 %v90, 96
    %v871 = vpop.permute.xlu0 %870
    %872 = vrot.lane.b32.xlu0 %v91, 96
    %v873 = vpop.permute.xlu0 %872
    %874 = vrot.lane.b32.xlu0 %v92, 96
    %v875 = vpop.permute.xlu0 %874
    %876 = vrot.lane.b32.xlu0 %v93, 96
    %v877 = vpop.permute.xlu0 %876
    %v883 = vsel %vm102, %v860, 0
    %v886 = vsel %vm102, %v861, 0
    %888 = vmatprep.subr.mxu0 0.0
    %889 = vmatpush1.msra.mxu0 0.0
    %890 = vmatprep.subr.mxu0 0.0
    %891 = vmatpush1.msra.mxu0 0.0
    %892 = vmatprep.subr.mxu0 0.0
    %893 = vmatpush1.msra.mxu0 0.0
    %894 = vmatprep.subr.mxu0 0.0
    %895 = vmatpush1.msra.mxu0 0.0
    %896 = vmatprep.subr.mxu0 0.0
    %897 = vmatpush1.msra.mxu0 0.0
    %898 = vmatprep.subr.mxu0 0.0
    %899 = vmatpush1.msra.mxu0 0.0
    %900 = vmatprep.subr.mxu0 0.0
    %901 = vmatpush1.msra.mxu0 0.0
    %902 = vmatprep.subr.mxu0 0.0
    %903 = vmatpush1.msra.mxu0 0.0
    %904 = vmatprep.subr.mxu0 0.0
    %905 = vmatpush1.msra.mxu0 0.0
    %906 = vmatprep.subr.mxu0 0.0
    %907 = vmatpush1.msra.mxu0 0.0
    %908 = vmatprep.subr.mxu0 0.0
    %909 = vmatpush1.msra.mxu0 0.0
    %910 = vmatprep.subr.mxu0 0.0
    %911 = vmatpush1.msra.mxu0 0.0
    %912 = vmatprep.subr.mxu0 0.0
    %913 = vmatpush1.msra.mxu0 %v877
    %914 = vmatprep.subr.mxu0 0.0
    %915 = vmatpush1.msra.mxu0 %v875
    %916 = vmatprep.subr.mxu0 0.0
    %917 = vmatpush1.msra.mxu0 %v873
    %918 = vmatprep.subr.mxu0 0.0
    %919 = vmatpush1.msra.mxu0 %v871
    %920 = vmatprep.subr.mxu0 0.0
    %921 = vmatpush2.msra.mxu0 0.0
    %922 = vmatprep.subr.mxu0 0.0
    %923 = vmatpush2.msra.mxu0 0.0
    %924 = vmatprep.subr.mxu0 0.0
    %925 = vmatpush2.msra.mxu0 0.0
    %926 = vmatprep.subr.mxu0 0.0
    %927 = vmatpush2.msra.mxu0 0.0
    %928 = vmatprep.subr.mxu0 0.0
    %929 = vmatpush2.msra.mxu0 0.0
    %930 = vmatprep.subr.mxu0 0.0
    %931 = vmatpush2.msra.mxu0 0.0
    %932 = vmatprep.subr.mxu0 0.0
    %933 = vmatpush2.msra.mxu0 0.0
    %934 = vmatprep.subr.mxu0 0.0
    %935 = vmatpush2.msra.mxu0 0.0
    %936 = vmatprep.subr.mxu0 0.0
    %937 = vmatpush2.msra.mxu0 0.0
    %938 = vmatprep.subr.mxu0 0.0
    %939 = vmatpush2.msra.mxu0 0.0
    %940 = vmatprep.subr.mxu0 0.0
    %941 = vmatpush2.msra.mxu0 0.0
    %942 = vmatprep.subr.mxu0 0.0
    %943 = vmatpush2.msra.mxu0 0.0
    %944 = vmatprep.subr.mxu0 0.0
    %945 = vmatpush2.msra.mxu0 0.0
    %946 = vmatprep.subr.mxu0 0.0
    %947 = vmatpush2.msra.mxu0 0.0
    %948 = vmatprep.subr.mxu0 0.0
    %949 = vmatpush2.msra.mxu0 0.0
    %950 = vmatprep.subr.mxu0 0.0
    %951 = vmatpush2.msra.mxu0 0.0
    %952 = vmatprep.mubr.f32.mxu0 0.0
    %953 = vmatmul.mubr.f32.gmra.mxu0 %v883
    %v954 = vpop.f32.mrf.mxu0
    %v955 = vadd.f32 %v865, %v954
    %v956 = vpop.f32.mrf.mxu0
    %957 = vmatprep.mubr.f32.mxu0 0.0
    %958 = vmatmul.mubr.f32.gmra.mxu0 %v886
    %v959 = vpop.f32.mrf.mxu0
    %v960 = vadd.f32 %v865, %v959
    %v961 = vpop.f32.mrf.mxu0
    %962 = vdwg.mxu0
    %v963 = vmax.f32 %v955, 0.0
    %v964 = vmax.f32 %v960, 0.0
    %v965 = vlaneseq
    %v966 = vshrl.u32 %v965, 7
    %v967 = vsub.s32 7, %v966
    %v968 = vrot.slane %v89, %v967
    %v970 = vsel %vm439, %v963, 0
    %v973 = vsel %vm439, %v964, 0
    %975 = vmatprep.subr.mxu0 0.0
    %976 = vmatpush1.msra.mxu0 0.0
    %977 = vmatprep.subr.mxu0 0.0
    %978 = vmatpush1.msra.mxu0 0.0
    %979 = vmatprep.subr.mxu0 0.0
    %980 = vmatpush1.msra.mxu0 0.0
    %981 = vmatprep.subr.mxu0 0.0
    %982 = vmatpush1.msra.mxu0 0.0
    %983 = vmatprep.subr.mxu0 0.0
    %984 = vmatpush1.msra.mxu0 0.0
    %985 = vmatprep.subr.mxu0 0.0
    %986 = vmatpush1.msra.mxu0 0.0
    %987 = vmatprep.subr.mxu0 0.0
    %988 = vmatpush1.msra.mxu0 0.0
    %989 = vmatprep.subr.mxu0 0.0
    %990 = vmatpush1.msra.mxu0 0.0
    %991 = vmatprep.subr.mxu0 0.0
    %992 = vmatpush1.msra.mxu0 %v101
    %993 = vmatprep.subr.mxu0 0.0
    %994 = vmatpush1.msra.mxu0 %v100
    %995 = vmatprep.subr.mxu0 0.0
    %996 = vmatpush1.msra.mxu0 %v99
    %997 = vmatprep.subr.mxu0 0.0
    %998 = vmatpush1.msra.mxu0 %v98
    %999 = vmatprep.subr.mxu0 0.0
    %1000 = vmatpush1.msra.mxu0 %v97
    %1001 = vmatprep.subr.mxu0 0.0
    %1002 = vmatpush1.msra.mxu0 %v96
    %1003 = vmatprep.subr.mxu0 0.0
    %1004 = vmatpush1.msra.mxu0 %v95
    %1005 = vmatprep.subr.mxu0 0.0
    %1006 = vmatpush1.msra.mxu0 %v94
    %1007 = vmatprep.subr.mxu0 0.0
    %1008 = vmatpush2.msra.mxu0 0.0
    %1009 = vmatprep.subr.mxu0 0.0
    %1010 = vmatpush2.msra.mxu0 0.0
    %1011 = vmatprep.subr.mxu0 0.0
    %1012 = vmatpush2.msra.mxu0 0.0
    %1013 = vmatprep.subr.mxu0 0.0
    %1014 = vmatpush2.msra.mxu0 0.0
    %1015 = vmatprep.subr.mxu0 0.0
    %1016 = vmatpush2.msra.mxu0 0.0
    %1017 = vmatprep.subr.mxu0 0.0
    %1018 = vmatpush2.msra.mxu0 0.0
    %1019 = vmatprep.subr.mxu0 0.0
    %1020 = vmatpush2.msra.mxu0 0.0
    %1021 = vmatprep.subr.mxu0 0.0
    %1022 = vmatpush2.msra.mxu0 0.0
    %1023 = vmatprep.subr.mxu0 0.0
    %1024 = vmatpush2.msra.mxu0 0.0
    %1025 = vmatprep.subr.mxu0 0.0
    %1026 = vmatpush2.msra.mxu0 0.0
    %1027 = vmatprep.subr.mxu0 0.0
    %1028 = vmatpush2.msra.mxu0 0.0
    %1029 = vmatprep.subr.mxu0 0.0
    %1030 = vmatpush2.msra.mxu0 0.0
    %1031 = vmatprep.subr.mxu0 0.0
    %1032 = vmatpush2.msra.mxu0 0.0
    %1033 = vmatprep.subr.mxu0 0.0
    %1034 = vmatpush2.msra.mxu0 0.0
    %1035 = vmatprep.subr.mxu0 0.0
    %1036 = vmatpush2.msra.mxu0 0.0
    %1037 = vmatprep.subr.mxu0 0.0
    %1038 = vmatpush2.msra.mxu0 0.0
    %1039 = vmatprep.mubr.f32.mxu0 0.0
    %1040 = vmatmul.mubr.f32.gmra.mxu0 %v970
    %v1041 = vpop.f32.mrf.mxu0
    %v1042 = vadd.f32 %v968, %v1041
    %v1043 = vpop.f32.mrf.mxu0
    %1044 = vmatprep.mubr.f32.mxu0 0.0
    %1045 = vmatmul.mubr.f32.gmra.mxu0 %v973
    %v1046 = vpop.f32.mrf.mxu0
    %v1047 = vadd.f32 %v968, %v1046
    %v1048 = vpop.f32.mrf.mxu0
    %1049 = vdwg.mxu0
    %v1050 = vadd.f32 %v806, %v1042
    %v1051 = vadd.f32 %v807, %v1047
    %1052 = vst.msk [vmem:[#allocation11] sm:$0xff] %vm102, %v1050
    %1053 = vst.msk [vmem:[#allocation11 + $0x8] sm:$0xff] %vm102, %v1051
    // Predicated region
    $region42: #{tpu_custom_call.1} parent=1 // pred_check
      _
    $region43: #{tpu_custom_call.1} parent=1 // pred_check_branch
      %1055 = sbr.rel (0) target = $region45
    $region44: #{tpu_custom_call.1} parent=1 // pred_region
      %s1057 = ssub.s32 256, 256
      %1058 = vsyncadd [#allocation4], %s1057
      %s1059 = sshll.u32 [#allocation11], 4
      %s1060 = int_to_ptr.vmem [resolvable:$true] %s1059
      %1065 = dma.vmem_to_hbm [thread:$0]  %s1060, 256, %s5, [#allocation4], 128, 128, 8
    $region45: #{tpu_custom_call.1} parent=1 // pred_fallthru
      _
    // Predicated region
    $region46: #{tpu_custom_call.1} parent=1 // pred_check
      _
    $region47: #{tpu_custom_call.1} parent=1 // pred_check_branch
      %1067 = sbr.rel (0) target = $region49
    $region48: #{tpu_custom_call.1} parent=1 // pred_region
      %1068 = dma.done [#allocation4], 256
    $region49: #{tpu_custom_call.1} parent=1 // pred_fallthru
      _
    %1069 = vsyncpa [#allocation3], 1
    %1070 = vsyncpa [#allocation6], 1
    %1071 = vsyncpa [#allocation9], 1
    %1072 = vsyncpa [#allocation4], 1

</llo_original>
